<compile_context>
chip_gen: v7x
topology: tpu7x:2x2x1
jax: 0.10.0
libtpu: 0.0.40
codegen_flags: <defaults>
</compile_context>

<pallas_src>
import functools

import jax
import jax.numpy as jnp
from jax import lax
from jax.experimental import pallas as pl
from jax.experimental.pallas import tpu as pltpu


def _round_up(x: int, m: int) -> int:
    return ((x + m - 1) // m) * m


def _sublane_multiple(dtype) -> int:
    # Sub-32-bit dtypes pack along sublanes: bf16 vreg is (16,128), int8 (32,128).
    return max(8, 32 // jnp.dtype(dtype).itemsize)


def _pick_batch_tile(b: int, pref: int, align: int) -> int:
    """Pick a batch tile: large for arithmetic intensity, but avoiding heavy
    zero-padding for awkward batch sizes, and preferring >=2 tiles (v7x 2-TC)."""
    b_al = _round_up(b, align)
    if b_al <= pref:
        return b_al
    cands = list(range(128, pref + 1, 128)) or [pref]
    best_key, best_t = None, cands[-1]
    for t in cands:
        t = _round_up(t, align)
        b_p = _round_up(b, t)
        ntiles = b_p // t
        # minimize padded work, prefer >=2 batch tiles, then larger tiles.
        key = (b_p, ntiles == 1, -t)
        if best_key is None or key < best_key:
            best_key, best_t = key, t
    return best_t


# --------------------------------------------------------------------------
# Kernel bodies
# --------------------------------------------------------------------------
def toy_ae_resident_kernel(x_ref, w_ref, o_ref):
    """W fully resident in VMEM (constant block index). One grid axis (batch)."""
    x = x_ref[...]                      # (TB, D_in_p)
    w = w_ref[...]                      # (D_hid_p, D_in_p)
    # h = x @ W^T : contract D_in of both operands -> no transpose of W.
    h = lax.dot_general(
        x, w,
        dimension_numbers=(((1,), (1,)), ((), ())),
        preferred_element_type=jnp.float32,
    )                                   # (TB, D_hid_p) f32
    # Reconstruction: cast LHS back to weight dtype (native bf16 MXU when bf16).
    y = jnp.dot(h.astype(w.dtype), w, preferred_element_type=jnp.float32)
    o_ref[...] = jnp.maximum(y, 0.0).astype(o_ref.dtype)


def toy_ae_streamed_kernel(x_ref, w_ref, o_ref, acc_ref):
    """Hidden-dim reduction streamed over grid axis 1 with an f32 accumulator."""
    k = pl.program_id(1)
    nk = pl.num_programs(1)
    is_first = k == 0
    is_last = k == nk - 1

    x = x_ref[...]                      # (TB, D_in_p)
    w = w_ref[...]                      # (TH, D_in_p)
    h = lax.dot_general(
        x, w,
        dimension_numbers=(((1,), (1,)), ((), ())),
        preferred_element_type=jnp.float32,
    )                                   # (TB, TH) f32
    partial = jnp.dot(h.astype(w.dtype), w, preferred_element_type=jnp.float32)

    # Prologue: write the partial directly (skip zero store + add).
    @pl.when(jnp.logical_and(is_first, jnp.logical_not(is_last)))
    def _():
        acc_ref[...] = partial

    # Middle steps: accumulate.
    @pl.when(jnp.logical_and(jnp.logical_not(is_first), jnp.logical_not(is_last)))
    def _():
        acc_ref[...] += partial

    # Epilogue: final add + ReLU + store, without writing the accumulator back.
    @pl.when(jnp.logical_and(is_last, jnp.logical_not(is_first)))
    def _():
        o_ref[...] = jnp.maximum(acc_ref[...] + partial, 0.0).astype(o_ref.dtype)

    # Single-step reduction: output directly from the partial.
    @pl.when(jnp.logical_and(is_last, is_first))
    def _():
        o_ref[...] = jnp.maximum(partial, 0.0).astype(o_ref.dtype)


# --------------------------------------------------------------------------
# Wrapper
# --------------------------------------------------------------------------
@functools.partial(jax.jit, static_argnames=("tb", "th", "w_resident_bytes"))
def toy_autoencoder_forward(x: jax.Array, w: jax.Array, *, tb: int = 512,
                            th: int = 512,
                            w_resident_bytes: int = 8 * 1024 * 1024) -> jax.Array:
    """x: (B, input_dim), w: (hidden_dim, input_dim). Returns relu((x @ w.T) @ w)."""
    B, D_in = x.shape
    D_hid, D_in_w = w.shape
    assert D_in == D_in_w, "weight / input dim mismatch"

    itemsize = jnp.dtype(x.dtype).itemsize
    sub = _sublane_multiple(x.dtype)

    # Lane-dense output: pad D_in to a multiple of 128.
    d_in_p = _round_up(D_in, 128)
    d_hid_p = _round_up(D_hid, sub)

    TB = _pick_batch_tile(B, tb, sub)

    # v7x-safe VMEM budget (64 MiB physical) with headroom for double buffering.
    VMEM_BUDGET = 48 * 1024 * 1024

    w_bytes = d_hid_p * d_in_p * itemsize
    resident = w_bytes <= w_resident_bytes

    if resident:
        # Footprint: resident W + double-buffered x + double-buffered out + h staging.
        def footprint_r(tb_):
            return (w_bytes
                    + 2 * tb_ * d_in_p * itemsize      # x (double buffered)
                    + 2 * tb_ * d_in_p * itemsize      # out (double buffered)
                    + tb_ * d_hid_p * 4)               # h staging (f32)
        while footprint_r(TB) > VMEM_BUDGET and TB > sub:
            TB = max(sub, _round_up(TB // 2, sub))
        fp = footprint_r(TB)
    else:
        TH = min(th, d_hid_p)
        TH = _round_up(TH, sub)
        d_hid_p = _round_up(D_hid, TH)

        def footprint_s(tb_, th_):
            return (2 * tb_ * d_in_p * itemsize        # x (double buffered)
                    + 2 * th_ * d_in_p * itemsize      # w (double buffered)
                    + 2 * tb_ * d_in_p * itemsize      # out (double buffered)
                    + tb_ * d_in_p * 4                 # acc scratch (f32)
                    + tb_ * th_ * 4)                   # h staging (f32)
        while footprint_s(TB, TH) > VMEM_BUDGET and (TB > 128 or TH > 128):
            if TB >= TH and TB > sub:
                TB = max(sub, _round_up(TB // 2, sub))
            elif TH > sub:
                TH = max(sub, _round_up(TH // 2, sub))
            else:
                break
        d_hid_p = _round_up(D_hid, TH)
        fp = footprint_s(TB, TH)

    b_p = _round_up(B, TB)

    # Zero padding keeps the math exact: padded D_in columns and padded hidden
    # rows of W contribute nothing to either matmul, and ReLU(0) = 0.
    xp = x
    if (b_p, d_in_p) != (B, D_in):
        xp = jnp.pad(x, ((0, b_p - B), (0, d_in_p - D_in)))
    wp = w
    if (d_hid_p, d_in_p) != (D_hid, D_in):
        wp = jnp.pad(w, ((0, d_hid_p - D_hid), (0, d_in_p - D_in)))

    # Scoped VMEM limit from the actual footprint (>= 32 MiB default, v7x-safe cap).
    vmem_limit = int(min(max(fp + (4 << 20), 32 << 20), 60 << 20))

    flops = 4 * B * D_hid * D_in  # two matmuls, 2 flops/MAC each

    if resident:
        cost = pl.CostEstimate(
            flops=flops, transcendentals=0,
            bytes_accessed=(2 * B * D_in + D_hid * D_in) * itemsize,
        )
        out_p = pl.pallas_call(
            toy_ae_resident_kernel,
            out_shape=jax.ShapeDtypeStruct((b_p, d_in_p), x.dtype),
            grid_spec=pltpu.PrefetchScalarGridSpec(
                num_scalar_prefetch=0,
                grid=(b_p // TB,),
                in_specs=[
                    # x tiles stream over the batch axis.
                    pl.BlockSpec((TB, d_in_p), lambda i: (i, 0)),
                    # Constant block index -> W fetched once, resident for all tiles.
                    pl.BlockSpec((d_hid_p, d_in_p), lambda i: (0, 0)),
                ],
                out_specs=pl.BlockSpec((TB, d_in_p), lambda i: (i, 0)),
            ),
            compiler_params=pltpu.CompilerParams(
                dimension_semantics=("parallel",),
                vmem_limit_bytes=vmem_limit,
            ),
            cost_estimate=cost,
        )(xp, wp)
    else:
        # W is re-read from HBM once per batch tile -> account for it.
        cost = pl.CostEstimate(
            flops=flops, transcendentals=0,
            bytes_accessed=(2 * B * D_in + (b_p // TB) * D_hid * D_in) * itemsize,
        )
        out_p = pl.pallas_call(
            toy_ae_streamed_kernel,
            out_shape=jax.ShapeDtypeStruct((b_p, d_in_p), x.dtype),
            grid_spec=pltpu.PrefetchScalarGridSpec(
                num_scalar_prefetch=0,
                grid=(b_p // TB, d_hid_p // TH),
                in_specs=[
                    pl.BlockSpec((TB, d_in_p), lambda i, k: (i, 0)),
                    pl.BlockSpec((TH, d_in_p), lambda i, k: (k, 0)),
                ],
                # Output block constant across k -> resident accumulator target.
                out_specs=pl.BlockSpec((TB, d_in_p), lambda i, k: (i, 0)),
                scratch_shapes=[pltpu.VMEM((TB, d_in_p), jnp.float32)],
            ),
            compiler_params=pltpu.CompilerParams(
                dimension_semantics=("parallel", "arbitrary"),
                vmem_limit_bytes=vmem_limit,
            ),
            cost_estimate=cost,
        )(xp, wp)

    return out_p[:B, :D_in]


if __name__ == "__main__":
    key = jax.random.PRNGKey(0)
    kx, kw, kx2, kw2 = jax.random.split(key, 4)

    # --- Test 1: toy shapes consistent with the module (W-resident fast path) ---
    B, D_in, D_hid = 8, 16, 4
    x = jax.random.normal(kx, (B, D_in), dtype=jnp.float32)
    # Deterministic init mimicking nn.Linear default (uniform +/- 1/sqrt(fan_in)).
    bound = 1.0 / jnp.sqrt(jnp.float32(D_in))
    w = jax.random.uniform(kw, (D_hid, D_in), dtype=jnp.float32,
                           minval=-bound, maxval=bound)

    out = jax.block_until_ready(toy_autoencoder_forward(x, w))
    ref = jnp.maximum((x @ w.T) @ w, 0.0)
    assert out.shape == (B, D_in)
    assert jnp.allclose(out, ref, atol=1e-5, rtol=1e-5), "resident path mismatch"

    # --- Test 2: force the streamed multi-step hidden reduction path ---
    B2, D_in2, D_hid2 = 16, 24, 20
    x2 = jax.random.normal(kx2, (B2, D_in2), dtype=jnp.float32)
    w2 = jax.random.uniform(kw2, (D_hid2, D_in2), dtype=jnp.float32,
                            minval=-bound, maxval=bound)
    out2 = jax.block_until_ready(
        toy_autoencoder_forward(x2, w2, th=8, w_resident_bytes=0))
    ref2 = jnp.maximum((x2 @ w2.T) @ w2, 0.0)
    assert out2.shape == (B2, D_in2)
    assert jnp.allclose(out2, ref2, atol=1e-5, rtol=1e-5), "streamed path mismatch"

    print("KERNEL_OK")
</pallas_src>

<mosaic_0001>
module attributes {stable_mosaic.version = 11 : i64} {
  func.func @toy_ae_resident_kernel(%arg0: i32, %arg1: memref<8x128xf32, #tpu.memory_space<vmem>>, %arg2: memref<8x128xf32, #tpu.memory_space<vmem>>, %arg3: memref<8x128xf32, #tpu.memory_space<vmem>>) attributes {dimension_semantics = [#tpu.dimension_semantics<parallel>], iteration_bounds = array<i64: 1>, scalar_prefetch = 0 : i64, scratch_operands = 0 : i64, tpu.core_type = #tpu.core_type<tc>, window_params = [{transform_indices = @transform_0, window_bounds = array<i64: 8, 128>}, {pipeline_mode = #tpu.pipeline_mode<synchronous>, transform_indices = @transform_1, window_bounds = array<i64: 8, 128>}, {transform_indices = @transform_2, window_bounds = array<i64: 8, 128>}]} {
    %c0 = arith.constant 0 : index
    %c0_0 = arith.constant 0 : index
    %0 = vector.load %arg1[%c0, %c0_0] : memref<8x128xf32, #tpu.memory_space<vmem>>, vector<8x128xf32>
    %c0_1 = arith.constant 0 : index
    %c0_2 = arith.constant 0 : index
    %1 = vector.load %arg2[%c0_1, %c0_2] : memref<8x128xf32, #tpu.memory_space<vmem>>, vector<8x128xf32>
    %cst = arith.constant dense<0.000000e+00> : vector<8x8xf32>
    %2 = tpu.matmul %0, %1, %cst {dimension_numbers = #tpu.dot_dimension_numbers<[1], [1], [0], [0], [0, 0, 1, 0], [], []>} : vector<8x128xf32>, vector<8x128xf32>, vector<8x8xf32> -> vector<8x8xf32>
    %cst_3 = arith.constant dense<0.000000e+00> : vector<8x128xf32>
    %3 = tpu.matmul %2, %1, %cst_3 {dimension_numbers = #tpu.dot_dimension_numbers<[1], [0], [0], [1], [0, 0, 1, 1], [], []>} : vector<8x8xf32>, vector<8x128xf32>, vector<8x128xf32> -> vector<8x128xf32>
    %cst_4 = arith.constant 0.000000e+00 : f32
    %4 = vector.broadcast %cst_4 : f32 to vector<8x128xf32>
    %5 = arith.maximumf %3, %4 : vector<8x128xf32>
    %c0_5 = arith.constant 0 : index
    %c0_6 = arith.constant 0 : index
    %6 = vector.load %arg3[%c0_5, %c0_6] : memref<8x128xf32, #tpu.memory_space<vmem>>, vector<8x128xf32>
    tpu.vector_store %arg3[%c0_5, %c0_6], %5 {strides = array<i32>} : memref<8x128xf32, #tpu.memory_space<vmem>>, vector<8x128xf32>,
    return
  }
  func.func @transform_0(%arg0: i32) -> (i32, i32) {
    %c0_i32 = arith.constant 0 : i32
    %c0_i32_0 = arith.constant 0 : i32
    return %arg0, %c0_i32 : i32, i32
  }
  func.func @transform_1(%arg0: i32) -> (i32, i32) {
    %c0_i32 = arith.constant 0 : i32
    %c0_i32_0 = arith.constant 0 : i32
    %c0_i32_1 = arith.constant 0 : i32
    return %c0_i32, %c0_i32_0 : i32, i32
  }
  func.func @transform_2(%arg0: i32) -> (i32, i32) {
    %c0_i32 = arith.constant 0 : i32
    %c0_i32_0 = arith.constant 0 : i32
    return %arg0, %c0_i32 : i32, i32
  }
}

</mosaic_0001>

<llo_original>
// kernel: toy_autoencoder_forward.1
$region0: #{toy_autoencoder_forward.1}
  #allocation0 [shape = 'u32[]', space=smem, size = 0x4, offset = 0x4, fixed_abs, tag = 'smem constant byte address 0x4 - core index']
  #allocation1 [shape = 'u32[144,128]{1,0:T(1,128)}', space=vmem, size = 0x12000, scoped, tag = 'internal scratch']
  %s0 = inlined_call_operand.vmem [shape: f32[8,128], index: 0, kind: input, shape index: {}]
  %s1 = inlined_call_operand.vmem [shape: f32[8,128], index: 1, kind: input, shape index: {}]
  %s2 = inlined_call_operand.hbm [shape: f32[8,128], index: 2, kind: output, shape index: {}]
  %s3 = sld [smem:[#allocation0]]
  $region18: #{toy_autoencoder_forward.1} parent=0
    _
  %s5 = ssub.s32 1, %s3
  %s6 = scalar_select 0, %s5, %s3
  $region1: #{toy_autoencoder_forward.1} parent=0
    #allocation2 [shape = 'u8[4096]{0}', space=vmem, size = 0x1000, scoped, tag = 'output window, operand 0, single buffered']
    #allocation3 [shape = 's32[1]{0}', space=sflag, size = 0x4, scoped, tag = 'scoped memory for toy_autoencoder_forward.1']
    %7 = vsyncpa [#allocation3], 0
    // Predicated region
    $region2: #{toy_autoencoder_forward.1} parent=1 // pred_check
      _
    $region3: #{toy_autoencoder_forward.1} parent=1 // pred_check_branch
      %9 = sbr.rel (0) target = $region5
    $region4: #{toy_autoencoder_forward.1} parent=1 // pred_region
      _
    $region5: #{toy_autoencoder_forward.1} parent=1 // pred_fallthru
      _
    // Predicated region
    $region6: #{toy_autoencoder_forward.1} parent=1 // pred_check
      _
    $region7: #{toy_autoencoder_forward.1} parent=1 // pred_check_branch
      %11 = sbr.rel (0) target = $region9
    $region8: #{toy_autoencoder_forward.1} parent=1 // pred_region
      _
    $region9: #{toy_autoencoder_forward.1} parent=1 // pred_fallthru
      _
    %v12 = vld [vmem:[%s0] sm:$0xff]
    %v13 = vld [vmem:[%s1] sm:$0xff]
    %14 = vmatprep.subr.mxu0 0.0
    %15 = vmatpush1.xpose.msra.mxu0 %v13
    %16 = vmatprep.subr.mxu0 0.0
    %17 = vmatpush1.xpose.msra.mxu0 0.0
    %18 = vmatprep.subr.mxu0 0.0
    %19 = vmatpush1.xpose.msra.mxu0 0.0
    %20 = vmatprep.subr.mxu0 0.0
    %21 = vmatpush1.xpose.msra.mxu0 0.0
    %22 = vmatprep.subr.mxu0 0.0
    %23 = vmatpush1.xpose.msra.mxu0 0.0
    %24 = vmatprep.subr.mxu0 0.0
    %25 = vmatpush1.xpose.msra.mxu0 0.0
    %26 = vmatprep.subr.mxu0 0.0
    %27 = vmatpush1.xpose.msra.mxu0 0.0
    %28 = vmatprep.subr.mxu0 0.0
    %29 = vmatpush1.xpose.msra.mxu0 0.0
    %30 = vmatprep.subr.mxu0 0.0
    %31 = vmatpush1.xpose.msra.mxu0 0.0
    %32 = vmatprep.subr.mxu0 0.0
    %33 = vmatpush1.xpose.msra.mxu0 0.0
    %34 = vmatprep.subr.mxu0 0.0
    %35 = vmatpush1.xpose.msra.mxu0 0.0
    %36 = vmatprep.subr.mxu0 0.0
    %37 = vmatpush1.xpose.msra.mxu0 0.0
    %38 = vmatprep.subr.mxu0 0.0
    %39 = vmatpush1.xpose.msra.mxu0 0.0
    %40 = vmatprep.subr.mxu0 0.0
    %41 = vmatpush1.xpose.msra.mxu0 0.0
    %42 = vmatprep.subr.mxu0 0.0
    %43 = vmatpush1.xpose.msra.mxu0 0.0
    %44 = vmatprep.subr.mxu0 0.0
    %45 = vmatpush1.xpose.msra.mxu0 0.0
    %46 = vmatprep.subr.mxu0 0.0
    %47 = vmatpush1.xpose.msra.mxu0 0.0
    %48 = vmatprep.subr.mxu0 0.0
    %49 = vmatpush1.xpose.msra.mxu0 0.0
    %50 = vmatprep.subr.mxu0 0.0
    %51 = vmatpush1.xpose.msra.mxu0 0.0
    %52 = vmatprep.subr.mxu0 0.0
    %53 = vmatpush1.xpose.msra.mxu0 0.0
    %54 = vmatprep.subr.mxu0 0.0
    %55 = vmatpush1.xpose.msra.mxu0 0.0
    %56 = vmatprep.subr.mxu0 0.0
    %57 = vmatpush1.xpose.msra.mxu0 0.0
    %58 = vmatprep.subr.mxu0 0.0
    %59 = vmatpush1.xpose.msra.mxu0 0.0
    %60 = vmatprep.subr.mxu0 0.0
    %61 = vmatpush1.xpose.msra.mxu0 0.0
    %62 = vmatprep.subr.mxu0 0.0
    %63 = vmatpush1.xpose.msra.mxu0 0.0
    %64 = vmatprep.subr.mxu0 0.0
    %65 = vmatpush1.xpose.msra.mxu0 0.0
    %66 = vmatprep.subr.mxu0 0.0
    %67 = vmatpush1.xpose.msra.mxu0 0.0
    %68 = vmatprep.subr.mxu0 0.0
    %69 = vmatpush1.xpose.msra.mxu0 0.0
    %70 = vmatprep.subr.mxu0 0.0
    %71 = vmatpush1.xpose.msra.mxu0 0.0
    %72 = vmatprep.subr.mxu0 0.0
    %73 = vmatpush1.xpose.msra.mxu0 0.0
    %74 = vmatprep.subr.mxu0 0.0
    %75 = vmatpush1.xpose.msra.mxu0 0.0
    %76 = vmatprep.subr.mxu0 0.0
    %77 = vmatpush1.xpose.msra.mxu0 0.0
    %78 = vmatprep.mubr.f32.mxu0 0.0
    %79 = vmatmul.mubr.f32.gmra.mrb[0].mxu0 %v12
    %v80 = vpop.f32.mrb[0].mxu0
    %v81 = vadd.f32 0.0, %v80
    %v82 = vpop.f32.mrb[0].mxu0
    %83 = vdwg.mxu0
    %vm84 = vcmask 64512
    %v86 = vsel %vm84, %v81, 0
    %88 = vmatprep.subr.mxu0 0.0
    %89 = vmatpush1.msra.mxu0 %v13
    %90 = vmatprep.subr.mxu0 0.0
    %91 = vmatpush1.msra.mxu0 0.0
    %92 = vmatprep.subr.mxu0 0.0
    %93 = vmatpush1.msra.mxu0 0.0
    %94 = vmatprep.subr.mxu0 0.0
    %95 = vmatpush1.msra.mxu0 0.0
    %96 = vmatprep.subr.mxu0 0.0
    %97 = vmatpush1.msra.mxu0 0.0
    %98 = vmatprep.subr.mxu0 0.0
    %99 = vmatpush1.msra.mxu0 0.0
    %100 = vmatprep.subr.mxu0 0.0
    %101 = vmatpush1.msra.mxu0 0.0
    %102 = vmatprep.subr.mxu0 0.0
    %103 = vmatpush1.msra.mxu0 0.0
    %104 = vmatprep.subr.mxu0 0.0
    %105 = vmatpush1.msra.mxu0 0.0
    %106 = vmatprep.subr.mxu0 0.0
    %107 = vmatpush1.msra.mxu0 0.0
    %108 = vmatprep.subr.mxu0 0.0
    %109 = vmatpush1.msra.mxu0 0.0
    %110 = vmatprep.subr.mxu0 0.0
    %111 = vmatpush1.msra.mxu0 0.0
    %112 = vmatprep.subr.mxu0 0.0
    %113 = vmatpush1.msra.mxu0 0.0
    %114 = vmatprep.subr.mxu0 0.0
    %115 = vmatpush1.msra.mxu0 0.0
    %116 = vmatprep.subr.mxu0 0.0
    %117 = vmatpush1.msra.mxu0 0.0
    %118 = vmatprep.subr.mxu0 0.0
    %119 = vmatpush1.msra.mxu0 0.0
    %120 = vmatprep.subr.mxu0 0.0
    %121 = vmatpush1.msra.mxu0 0.0
    %122 = vmatprep.subr.mxu0 0.0
    %123 = vmatpush1.msra.mxu0 0.0
    %124 = vmatprep.subr.mxu0 0.0
    %125 = vmatpush1.msra.mxu0 0.0
    %126 = vmatprep.subr.mxu0 0.0
    %127 = vmatpush1.msra.mxu0 0.0
    %128 = vmatprep.subr.mxu0 0.0
    %129 = vmatpush1.msra.mxu0 0.0
    %130 = vmatprep.subr.mxu0 0.0
    %131 = vmatpush1.msra.mxu0 0.0
    %132 = vmatprep.subr.mxu0 0.0
    %133 = vmatpush1.msra.mxu0 0.0
    %134 = vmatprep.subr.mxu0 0.0
    %135 = vmatpush1.msra.mxu0 0.0
    %136 = vmatprep.subr.mxu0 0.0
    %137 = vmatpush1.msra.mxu0 0.0
    %138 = vmatprep.subr.mxu0 0.0
    %139 = vmatpush1.msra.mxu0 0.0
    %140 = vmatprep.subr.mxu0 0.0
    %141 = vmatpush1.msra.mxu0 0.0
    %142 = vmatprep.subr.mxu0 0.0
    %143 = vmatpush1.msra.mxu0 0.0
    %144 = vmatprep.subr.mxu0 0.0
    %145 = vmatpush1.msra.mxu0 0.0
    %146 = vmatprep.subr.mxu0 0.0
    %147 = vmatpush1.msra.mxu0 0.0
    %148 = vmatprep.subr.mxu0 0.0
    %149 = vmatpush1.msra.mxu0 0.0
    %150 = vmatprep.subr.mxu0 0.0
    %151 = vmatpush1.msra.mxu0 0.0
    %152 = vmatprep.mubr.f32.mxu0 0.0
    %153 = vmatmul.mubr.f32.gmra.mrb[0].mxu0 %v86
    %v154 = vpop.f32.mrb[0].mxu0
    %v155 = vadd.f32 0.0, %v154
    %v156 = vpop.f32.mrb[0].mxu0
    %157 = vdwg.mxu0
    %v158 = vmax.f32 %v155, 0.0
    %159 = vst [vmem:[#allocation2] sm:$0xff] %v158
    // Predicated region
    $region10: #{toy_autoencoder_forward.1} parent=1 // pred_check
      _
    $region11: #{toy_autoencoder_forward.1} parent=1 // pred_check_branch
      %161 = sbr.rel (0) target = $region13
    $region12: #{toy_autoencoder_forward.1} parent=1 // pred_region
      %s163 = ssub.s32 128, 128
      %164 = vsyncadd [#allocation3], %s163
      %s166 = sshll.u32 [#allocation2], 4
      %s167 = int_to_ptr.vmem [resolvable:$true] %s166
      %169 = dma.vmem_to_hbm [thread:$0]  %s167, 128, %s2, [#allocation3]
    $region13: #{toy_autoencoder_forward.1} parent=1 // pred_fallthru
      _
    // Predicated region
    $region14: #{toy_autoencoder_forward.1} parent=1 // pred_check
      _
    $region15: #{toy_autoencoder_forward.1} parent=1 // pred_check_branch
      %171 = sbr.rel (0) target = $region17
    $region16: #{toy_autoencoder_forward.1} parent=1 // pred_region
      %172 = dma.done [#allocation3], 128
    $region17: #{toy_autoencoder_forward.1} parent=1 // pred_fallthru
      _
    %173 = vsyncpa [#allocation3], 1

</llo_original>
